<compile_context>
chip_gen: v6e
topology: v6e:2x2x1
jax: 0.10.0
libtpu: 0.0.40
codegen_flags: <defaults>
</compile_context>

<pallas_src>
import functools

import jax
import jax.numpy as jnp
from jax import lax
from jax.experimental import pallas as pl
from jax.experimental.pallas import tpu as pltpu


def _round_up(v, m):
    return (v + m - 1) // m * m


_TM_CANDIDATES = (1024, 512, 256, 128, 64, 32, 16, 8)
_IDENT_COL_TILE = 2048            # output-column tile for the identity path


@functools.lru_cache(maxsize=None)
def _vmem_budget():
    """Generation-aware (scoped VMEM limit, tile budget) in bytes."""
    try:
        phys = int(pltpu.get_tpu_info().vmem_capacity_bytes)
    except Exception:
        phys = 64 * 1024 * 1024                      # conservative v7x-sized fallback
    # ~3/4 of physical VMEM as the scoped limit (96 MiB on 128-MiB v5e/v6e,
    # 48 MiB on v7x), ~80% of that as the tile budget (headroom for Mosaic).
    limit = min(phys * 3 // 4, 96 * 1024 * 1024)
    budget = limit * 4 // 5
    return limit, budget


def _pick_tm(m, per_row_bytes, budget_bytes, *, tm_cap, fixed_bytes=0):
    """Largest row tile (multiple of 8, <= tm_cap) whose footprint fits budget."""
    tm = 8
    for cand in _TM_CANDIDATES:
        if cand > tm_cap:
            continue
        if fixed_bytes + cand * per_row_bytes <= budget_bytes:
            tm = cand
            break
    return min(tm, _round_up(m, 8))


# ----------------------------------------------------------------------------
# Identity fast-path kernels: weight == zero-padded identity  =>  copy (+ bias).
# ----------------------------------------------------------------------------
def _identity_narrow_kernel(x_ref, b_ref, o_ref):
    # n <= k:  y = x[:, :tn] + b   (x block may be a bit wider for lane alignment)
    tn = o_ref.shape[-1]
    xv = x_ref[:, :tn].astype(b_ref.dtype)
    o_ref[...] = (xv + b_ref[...]).astype(o_ref.dtype)


def _identity_wide_kernel(x_ref, b_ref, o_ref, *, min_dim):
    # n > k: columns < min_dim copy x (+bias); columns >= min_dim are bias only.
    # Single full-width lane-dense store; the (possibly unaligned) boundary is
    # handled with a column-index mask instead of two masked split stores.
    tm, tn = o_ref.shape
    kb = x_ref.shape[-1]
    xv = x_ref[...].astype(b_ref.dtype)
    if kb < tn:
        xv = jnp.concatenate([xv, jnp.zeros((tm, tn - kb), b_ref.dtype)], axis=-1)
    col = pl.program_id(1) * tn + lax.broadcasted_iota(jnp.int32, (tm, tn), 1)
    y = jnp.where(col < min_dim, xv, jnp.zeros_like(xv)) + b_ref[...]
    o_ref[...] = y.astype(o_ref.dtype)


def _identity_forward_2d(x2d, bias, n):
    m, k = x2d.shape
    vmem_limit, budget = _vmem_budget()
    out_dtype = x2d.dtype
    # Do the add in the input dtype on bf16 (v6e/v7x bf16 VPU); f32 otherwise.
    comp = jnp.bfloat16 if x2d.dtype == jnp.bfloat16 else jnp.float32
    b_row = (jnp.zeros((n,), comp) if bias is None else bias.astype(comp)).reshape(1, n)

    xi = x2d.dtype.itemsize
    oi = jnp.dtype(out_dtype).itemsize
    bi = jnp.dtype(comp).itemsize

    tn = n if n <= _IDENT_COL_TILE else _IDENT_COL_TILE
    if n <= k:
        # Only the first n input columns are ever used; keep the x block
        # lane-aligned so unused columns are never streamed from HBM.
        kxb = min(k, _round_up(tn, 128))
        x_map = lambda i, j: (i, j)
        kernel = _identity_narrow_kernel
    else:
        kxb = min(k, tn)
        nxb = pl.cdiv(k, kxb)            # clamp x column-block index past k
        x_map = lambda i, j: (i, jnp.minimum(j, nxb - 1))
        kernel = functools.partial(_identity_wide_kernel, min_dim=k)

    per_row = 2 * (kxb * xi + tn * oi)   # double-buffered x + output rows
    fixed = 2 * tn * bi                  # resident bias block
    tm = _pick_tm(m, per_row, budget, tm_cap=1024, fixed_bytes=fixed)
    grid = (pl.cdiv(m, tm), pl.cdiv(n, tn))

    cost = pl.CostEstimate(
        flops=m * min(k, n), transcendentals=0,
        bytes_accessed=m * min(k, n) * xi + m * n * oi + n * bi)

    return pl.pallas_call(
        kernel,
        out_shape=jax.ShapeDtypeStruct((m, n), out_dtype),
        grid_spec=pltpu.PrefetchScalarGridSpec(
            num_scalar_prefetch=0,
            grid=grid,
            in_specs=[pl.BlockSpec((tm, kxb), x_map),
                      pl.BlockSpec((1, tn), lambda i, j: (0, j))],
            out_specs=pl.BlockSpec((tm, tn), lambda i, j: (i, j)),
        ),
        compiler_params=pltpu.CompilerParams(
            dimension_semantics=("parallel", "parallel"),
            vmem_limit_bytes=vmem_limit),
        cost_estimate=cost,
    )(x2d, b_row)


# ----------------------------------------------------------------------------
# General path: arbitrary weight, y = x @ W.T + b on the MXU with K-tiling.
# ----------------------------------------------------------------------------
def _matmul_kernel(x_ref, w_ref, o_ref, acc_ref):
    @pl.when(pl.program_id(2) == 0)
    def _():
        acc_ref[...] = jnp.zeros_like(acc_ref)
    acc_ref[...] += jnp.dot(x_ref[...], w_ref[...],
                            preferred_element_type=jnp.float32)

    @pl.when(pl.program_id(2) == pl.num_programs(2) - 1)
    def _():
        o_ref[...] = acc_ref[...].astype(o_ref.dtype)


def _matmul_bias_kernel(x_ref, w_ref, b_ref, o_ref, acc_ref):
    @pl.when(pl.program_id(2) == 0)
    def _():
        acc_ref[...] = jnp.zeros_like(acc_ref)
    acc_ref[...] += jnp.dot(x_ref[...], w_ref[...],
                            preferred_element_type=jnp.float32)

    @pl.when(pl.program_id(2) == pl.num_programs(2) - 1)
    def _():
        o_ref[...] = (acc_ref[...] + b_ref[...]).astype(o_ref.dtype)


def _choose_tk(k, max_tk=1024):
    if k <= max_tk:
        return k
    for cand in (1024, 512, 256):
        if k % cand == 0:
            return cand
    return 512        # ragged K -> wrapper zero-pads to a multiple of 512


def _general_forward_2d(x2d, weight, bias):
    m, k = x2d.shape
    n = weight.shape[0]
    vmem_limit, budget = _vmem_budget()

    # Compute in the promoted dtype (never silently downcast an f32 weight).
    comp = jnp.promote_types(x2d.dtype, weight.dtype)
    x2d = x2d.astype(comp)
    # One-time HBM-side transpose to (K, N): contraction is lhs-last x rhs-first,
    # so Mosaic never needs a per-tile XLU transpose of the weight block.
    wT = weight.astype(comp).T

    tk = _choose_tk(k)
    kp = _round_up(k, tk)
    if kp != k:                      # zero-pad K once; zeros never pollute the sum
        x2d = jnp.pad(x2d, ((0, 0), (0, kp - k)))
        wT = jnp.pad(wT, ((0, kp - k), (0, 0)))

    # TODO(synk): for very small N (< 128 lanes) a plain XLA matmul would avoid
    #             lane-sparse masked stores; kept on the Pallas path for now.
    tn = 256 if n > 256 else n
    ci = jnp.dtype(comp).itemsize
    per_row = 2 * (tk * ci + tn * ci) + tn * 4        # x + out (dbl-buf) + f32 acc
    fixed = 2 * (tk * tn * ci + tn * 4)               # weight + bias blocks (dbl-buf)
    tm = _pick_tm(m, per_row, budget, tm_cap=512, fixed_bytes=fixed)

    grid = (pl.cdiv(m, tm), pl.cdiv(n, tn), kp // tk)
    x_spec = pl.BlockSpec((tm, tk), lambda i, j, kk: (i, kk))
    w_spec = pl.BlockSpec((tk, tn), lambda i, j, kk: (kk, j))
    out_spec = pl.BlockSpec((tm, tn), lambda i, j, kk: (i, j))
    scratch = [pltpu.VMEM((tm, tn), jnp.float32)]
    params = pltpu.CompilerParams(
        dimension_semantics=("parallel", "parallel", "arbitrary"),
        vmem_limit_bytes=vmem_limit)
    cost = pl.CostEstimate(
        flops=2 * m * kp * n, transcendentals=0,
        bytes_accessed=(m * kp + kp * n + m * n) * ci + (n * 4 if bias is not None else 0))

    if bias is not None:
        b_row = bias.reshape(1, n).astype(jnp.float32)     # bias stays f32
        return pl.pallas_call(
            _matmul_bias_kernel,
            out_shape=jax.ShapeDtypeStruct((m, n), comp),
            grid_spec=pltpu.PrefetchScalarGridSpec(
                num_scalar_prefetch=0, grid=grid,
                in_specs=[x_spec, w_spec,
                          pl.BlockSpec((1, tn), lambda i, j, kk: (0, j))],
                out_specs=out_spec,
                scratch_shapes=scratch),
            compiler_params=params, cost_estimate=cost,
        )(x2d, wT, b_row)

    return pl.pallas_call(
        _matmul_kernel,
        out_shape=jax.ShapeDtypeStruct((m, n), comp),
        grid_spec=pltpu.PrefetchScalarGridSpec(
            num_scalar_prefetch=0, grid=grid,
            in_specs=[x_spec, w_spec],
            out_specs=out_spec,
            scratch_shapes=scratch),
        compiler_params=params, cost_estimate=cost,
    )(x2d, wT)


# ----------------------------------------------------------------------------
# Public forward + parameter init mirroring MatrixALinear
# ----------------------------------------------------------------------------
def matrix_a_linear_forward(x, weight, bias=None, *, identity_weight=False):
    """y = x @ weight.T + bias (PyTorch nn.Linear semantics).

    x      : (..., input_dim)
    weight : (output_dim, input_dim)
    bias   : (output_dim,) or None
    identity_weight=True selects the fast path that exploits MatrixALinear's
    zero-padded-identity initialization (no matmul, no weight read).
    """
    n, k = weight.shape
    assert x.shape[-1] == k, (x.shape, weight.shape)
    lead = x.shape[:-1]
    x2d = x.reshape(-1, k)
    if identity_weight:
        if bias is None and n == k:
            return x                        # exact no-op: skip the HBM round trip
        if bias is None and n < k:
            return x[..., :n]               # pure slice: no kernel needed
        out2d = _identity_forward_2d(x2d, bias, n)
    else:
        out2d = _general_forward_2d(x2d, weight, bias)
    return out2d.reshape(*lead, n)


def make_matrix_a_linear_params(input_dim, output_dim, bias=True, seed=0):
    """weight = zeros(output_dim, input_dim) with identity in the top-left
    min_dim block; bias ~ U(-1/sqrt(input_dim), 1/sqrt(input_dim)) like nn.Linear."""
    min_dim = min(input_dim, output_dim)
    weight = jnp.zeros((output_dim, input_dim), dtype=jnp.float32)
    weight = weight.at[:min_dim, :min_dim].set(jnp.eye(min_dim, dtype=jnp.float32))
    if bias:
        bound = 1.0 / float(input_dim) ** 0.5
        b = jax.random.uniform(
            jax.random.PRNGKey(seed + 1), (output_dim,),
            minval=-bound, maxval=bound, dtype=jnp.float32)
    else:
        b = None
    return weight, b


if __name__ == "__main__":
    key = jax.random.PRNGKey(0)
    ks = jax.random.split(key, 10)

    def ref_linear(x, w, b):
        y = jnp.einsum("...k,nk->...n", x, w, precision=lax.Precision.HIGHEST)
        return y if b is None else y + b

    # 1) identity fast path, n < k, with bias (batch=2, seq=8, 32 -> 16)
    x1 = jax.random.normal(ks[0], (2, 8, 32), dtype=jnp.float32)
    w1, b1 = make_matrix_a_linear_params(32, 16, bias=True, seed=0)
    r1 = ref_linear(x1, w1, b1)
    y1 = jax.block_until_ready(matrix_a_linear_forward(x1, w1, b1, identity_weight=True))
    assert y1.shape == (2, 8, 16), y1.shape
    assert jnp.allclose(y1, r1, atol=1e-5, rtol=1e-5), float(jnp.abs(y1 - r1).max())

    # 1b) same inputs through the general (MXU) path
    y1g = jax.block_until_ready(matrix_a_linear_forward(x1, w1, b1, identity_weight=False))
    assert jnp.allclose(y1g, r1, atol=2e-2, rtol=2e-2), float(jnp.abs(y1g - r1).max())

    # 2) identity fast path, n > k (zero padding), no bias (16 -> 32)
    x2 = jax.random.normal(ks[1], (2, 8, 16), dtype=jnp.float32)
    w2, _ = make_matrix_a_linear_params(16, 32, bias=False, seed=1)
    r2 = ref_linear(x2, w2, None)
    y2 = jax.block_until_ready(matrix_a_linear_forward(x2, w2, None, identity_weight=True))
    assert jnp.allclose(y2, r2, atol=1e-5, rtol=1e-5), float(jnp.abs(y2 - r2).max())

    # 3) general path with K-tiling (K=1536 -> 3 reduction steps), random weight + bias
    x3 = jax.random.normal(ks[2], (2, 8, 1536), dtype=jnp.float32)
    w3 = 0.02 * jax.random.normal(ks[3], (256, 1536), dtype=jnp.float32)
    b3 = jax.random.normal(ks[4], (256,), dtype=jnp.float32)
    r3 = ref_linear(x3, w3, b3)
    y3 = jax.block_until_ready(matrix_a_linear_forward(x3, w3, b3, identity_weight=False))
    assert jnp.allclose(y3, r3, atol=2e-2, rtol=2e-2), float(jnp.abs(y3 - r3).max())

    # 4) general path, ragged K (K=1300 -> zero-padded to 1536), no bias
    x4 = jax.random.normal(ks[5], (2, 8, 1300), dtype=jnp.float32)
    w4 = 0.02 * jax.random.normal(ks[6], (200, 1300), dtype=jnp.float32)
    r4 = ref_linear(x4, w4, None)
    y4 = jax.block_until_ready(matrix_a_linear_forward(x4, w4, None, identity_weight=False))
    assert jnp.allclose(y4, r4, atol=2e-2, rtol=2e-2), float(jnp.abs(y4 - r4).max())

    # 5) identity path with column tiling, n == k = 2304 (> 2048 tile), with bias
    x5 = jax.random.normal(ks[7], (16, 2304), dtype=jnp.float32)
    w5, b5 = make_matrix_a_linear_params(2304, 2304, bias=True, seed=2)
    r5 = ref_linear(x5, w5, b5)
    y5 = jax.block_until_ready(matrix_a_linear_forward(x5, w5, b5, identity_weight=True))
    assert jnp.allclose(y5, r5, atol=1e-5, rtol=1e-5), float(jnp.abs(y5 - r5).max())

    # 6) identity path, wide output + column tiling (k=100 -> n=2304), with bias
    x6 = jax.random.normal(ks[8], (16, 100), dtype=jnp.float32)
    w6, b6 = make_matrix_a_linear_params(100, 2304, bias=True, seed=3)
    r6 = ref_linear(x6, w6, b6)
    y6 = jax.block_until_ready(matrix_a_linear_forward(x6, w6, b6, identity_weight=True))
    assert jnp.allclose(y6, r6, atol=1e-5, rtol=1e-5), float(jnp.abs(y6 - r6).max())

    # 7) trivial short-circuits (no kernel launch)
    x7 = jax.random.normal(ks[9], (2, 8, 32), dtype=jnp.float32)
    w7, _ = make_matrix_a_linear_params(32, 32, bias=False, seed=4)
    y7 = jax.block_until_ready(matrix_a_linear_forward(x7, w7, None, identity_weight=True))
    assert jnp.allclose(y7, ref_linear(x7, w7, None), atol=1e-5, rtol=1e-5)
    w8, _ = make_matrix_a_linear_params(32, 16, bias=False, seed=5)
    y8 = jax.block_until_ready(matrix_a_linear_forward(x7, w8, None, identity_weight=True))
    assert jnp.allclose(y8, ref_linear(x7, w8, None), atol=1e-5, rtol=1e-5)

    print("KERNEL_OK")
</pallas_src>

<mosaic_0001>
module attributes {stable_mosaic.version = 11 : i64} {
  func.func @_identity_narrow_kernel(%arg0: i32, %arg1: i32, %arg2: memref<16x32xf32, #tpu.memory_space<vmem>>, %arg3: memref<1x16xf32, #tpu.memory_space<vmem>>, %arg4: memref<16x16xf32, #tpu.memory_space<vmem>>) attributes {dimension_semantics = [#tpu.dimension_semantics<parallel>, #tpu.dimension_semantics<parallel>], iteration_bounds = array<i64: 1, 1>, scalar_prefetch = 0 : i64, scratch_operands = 0 : i64, tpu.core_type = #tpu.core_type<tc>, window_params = [{transform_indices = @transform_0, window_bounds = array<i64: 16, 32>}, {transform_indices = @transform_1, window_bounds = array<i64: 1, 16>}, {transform_indices = @transform_2, window_bounds = array<i64: 16, 16>}]} {
    %c0 = arith.constant 0 : index
    %c0_0 = arith.constant 0 : index
    %0 = vector.load %arg2[%c0, %c0_0] : memref<16x32xf32, #tpu.memory_space<vmem>>, vector<16x16xf32>
    %c0_1 = arith.constant 0 : index
    %c0_2 = arith.constant 0 : index
    %1 = vector.load %arg3[%c0_1, %c0_2] : memref<1x16xf32, #tpu.memory_space<vmem>>, vector<1x16xf32>
    %2 = vector.broadcast %1 : vector<1x16xf32> to vector<16x16xf32>
    %3 = arith.addf %0, %2 : vector<16x16xf32>
    %c0_3 = arith.constant 0 : index
    %c0_4 = arith.constant 0 : index
    %4 = vector.load %arg4[%c0_3, %c0_4] : memref<16x16xf32, #tpu.memory_space<vmem>>, vector<16x16xf32>
    tpu.vector_store %arg4[%c0_3, %c0_4], %3 {strides = array<i32>} : memref<16x16xf32, #tpu.memory_space<vmem>>, vector<16x16xf32>,
    return
  }
  func.func @transform_0(%arg0: i32, %arg1: i32) -> (i32, i32) {
    %c0_i32 = arith.constant 0 : i32
    return %arg0, %arg1 : i32, i32
  }
  func.func @transform_1(%arg0: i32, %arg1: i32) -> (i32, i32) {
    %c0_i32 = arith.constant 0 : i32
    %c0_i32_0 = arith.constant 0 : i32
    return %c0_i32, %arg1 : i32, i32
  }
  func.func @transform_2(%arg0: i32, %arg1: i32) -> (i32, i32) {
    %c0_i32 = arith.constant 0 : i32
    return %arg0, %arg1 : i32, i32
  }
}

</mosaic_0001>

<llo_original>
// kernel: tpu_custom_call.1
$region0: #{tpu_custom_call.1}
  #allocation0 [shape = 'u32[]', space=smem, size = 0x4, offset = 0x4, fixed_abs, tag = 'smem constant byte address 0x4 - core index']
  #allocation1 [shape = 'u32[144,128]{1,0:T(1,128)}', space=vmem, size = 0x12000, scoped, tag = 'internal scratch']
  %s0 = inlined_call_operand.hbm [shape: f32[16,32], index: 0, kind: input, shape index: {}]
  %s1 = inlined_call_operand.vmem [shape: f32[1,16], index: 1, kind: input, shape index: {}]
  %s2 = inlined_call_operand.hbm [shape: f32[16,16], index: 2, kind: output, shape index: {}]
  %s3 = sld [smem:[#allocation0]]
  $region22: #{tpu_custom_call.1} parent=0
    _
  %s5 = ssub.s32 1, %s3
  %s6 = scalar_select 0, %s5, %s3
  $region1: #{tpu_custom_call.1} parent=0
    #allocation2 [shape = 'u8[8192]{0}', space=vmem, size = 0x2000, scoped, tag = 'input window, operand 0, single buffered']
    #allocation3 [shape = 's32[1]{0}', space=sflag, size = 0x4, scoped, tag = 'scoped memory for tpu_custom_call.1']
    #allocation4 [shape = 's32[1]{0}', space=sflag, size = 0x4, scoped, tag = 'scoped memory for tpu_custom_call.1']
    #allocation5 [shape = 'u8[8192]{0}', space=vmem, size = 0x2000, scoped, tag = 'output window, operand 0, single buffered']
    %7 = vsyncpa [#allocation3], 0
    %8 = vsyncpa [#allocation4], 0
    // Predicated region
    $region2: #{tpu_custom_call.1} parent=1 // pred_check
      _
    $region3: #{tpu_custom_call.1} parent=1 // pred_check_branch
      %10 = sbr.rel (0) target = $region5
    $region4: #{tpu_custom_call.1} parent=1 // pred_region
      %s12 = ssub.s32 256, 256
      %13 = vsyncadd [#allocation3], %s12
      %s14 = sshll.u32 [#allocation2], 4
      %s15 = int_to_ptr.vmem [resolvable:$true] %s14
      %20 = dma.hbm_to_vmem [thread:$0]  %s0, 256, %s15, [#allocation3], 128, 128, 8
    $region5: #{tpu_custom_call.1} parent=1 // pred_fallthru
      _
    // Predicated region
    $region6: #{tpu_custom_call.1} parent=1 // pred_check
      _
    $region7: #{tpu_custom_call.1} parent=1 // pred_check_branch
      %22 = sbr.rel (0) target = $region9
    $region8: #{tpu_custom_call.1} parent=1 // pred_region
      _
    $region9: #{tpu_custom_call.1} parent=1 // pred_fallthru
      _
    // Predicated region
    $region10: #{tpu_custom_call.1} parent=1 // pred_check
      _
    $region11: #{tpu_custom_call.1} parent=1 // pred_check_branch
      %24 = sbr.rel (0) target = $region13
    $region12: #{tpu_custom_call.1} parent=1 // pred_region
      %25 = dma.done [#allocation3], 256
    $region13: #{tpu_custom_call.1} parent=1 // pred_fallthru
      _
    %v26 = vld [vmem:[#allocation2] sm:$0xff]
    %v27 = vld [vmem:[#allocation2 + $0x8] sm:$0xff]
    %v28 = vld [vmem:[%s1] sm:$0x1]
    %v30 = vlaneseq
    %v31 = vshrl.u32 %v30, 7
    %v32 = vsub.s32 0, %v31
    %v33 = vrot.slane %v28, %v32
    %v35 = vadd.f32 %v26, %v33
    %v36 = vadd.f32 %v27, %v33
    %vm37 = vcmask 130048
    %38 = vst.msk [vmem:[#allocation5] sm:$0xff] %vm37, %v35
    %39 = vst.msk [vmem:[#allocation5 + $0x8] sm:$0xff] %vm37, %v36
    // Predicated region
    $region14: #{tpu_custom_call.1} parent=1 // pred_check
      _
    $region15: #{tpu_custom_call.1} parent=1 // pred_check_branch
      %41 = sbr.rel (0) target = $region17
    $region16: #{tpu_custom_call.1} parent=1 // pred_region
      %s43 = ssub.s32 256, 256
      %44 = vsyncadd [#allocation4], %s43
      %s45 = sshll.u32 [#allocation5], 4
      %s46 = int_to_ptr.vmem [resolvable:$true] %s45
      %51 = dma.vmem_to_hbm [thread:$0]  %s46, 256, %s2, [#allocation4], 128, 128, 8
    $region17: #{tpu_custom_call.1} parent=1 // pred_fallthru
      _
    // Predicated region
    $region18: #{tpu_custom_call.1} parent=1 // pred_check
      _
    $region19: #{tpu_custom_call.1} parent=1 // pred_check_branch
      %53 = sbr.rel (0) target = $region21
    $region20: #{tpu_custom_call.1} parent=1 // pred_region
      %54 = dma.done [#allocation4], 256
    $region21: #{tpu_custom_call.1} parent=1 // pred_fallthru
      _
    %55 = vsyncpa [#allocation3], 1
    %56 = vsyncpa [#allocation4], 1

</llo_original>
